<compile_context>
chip_gen: v7x
topology: tpu7x:2x2x1
jax: 0.10.0
libtpu: 0.0.40
codegen_flags: <defaults>
</compile_context>

<pallas_src>
import jax
import jax.numpy as jnp
from jax.experimental import pallas as pl
from jax.experimental.pallas import tpu as pltpu


def _round_up(n, m):
    return ((n + m - 1) // m) * m


def duel_dqn_kernel(x_ref, w1_ref, b1_ref, wq_ref, bq_ref, q_ref, act_ref):
    # x: [TB, F] f32 (cast to bf16 in-register)   w1: [F, H] bf16   b1: [1, H] f32
    # wq: [H, A] bf16 (fused dueling head)        bq: [1, A] f32
    x = x_ref[...].astype(jnp.bfloat16)
    h = jnp.dot(x, w1_ref[...], preferred_element_type=jnp.float32)
    # f32 bias-add + ReLU on the VPU, then materialize h once as bf16 for the MXU.
    h = jnp.maximum(h + b1_ref[...], 0.0).astype(jnp.bfloat16)
    q = jnp.dot(h, wq_ref[...], preferred_element_type=jnp.float32) + bq_ref[...]
    q_ref[...] = q.astype(q_ref.dtype)

    # Fused greedy action: first index attaining the row max (argmax tie-break).
    # Two XLU passes (max, then index-min) sit in slack slots at these sizes.
    n_act = q.shape[-1]
    col = jax.lax.broadcasted_iota(jnp.int32, q.shape, 1)
    qmax = jnp.max(q, axis=-1, keepdims=True)
    act_ref[...] = jnp.min(jnp.where(q == qmax, col, jnp.int32(n_act)),
                           axis=-1, keepdims=True)


def duel_dqn_forward(x, params, *, batch_tile=2048, max_tile=8192,
                     min_split_rows=512):
    """x: [B, in_features] float. params: fused (w1, b1, wq, bq) from fuse_params().

    Returns (q [B, n_actions] float32, greedy_action [B] int32).
    """
    w1, b1, wq, bq = params
    B, F = x.shape
    H = w1.shape[1]
    A = wq.shape[1]

    batch_tile = min(batch_tile, max_tile)  # keep h (bf16, ~0.5 KB/row) well under VMEM
    # Balanced tiling: tiles divide the padded batch evenly; >=2 grid steps once B is
    # large enough that v7x's 2 TensorCores can both be fed via the parallel axis.
    num_tiles = -(-B // batch_tile)
    if num_tiles == 1 and B >= min_split_rows:
        num_tiles = 2
    if num_tiles == 1:
        tb = _round_up(B, 8)                 # pad-free single tile for 8-aligned small B
    else:
        tb = _round_up(-(-B // num_tiles), 16)   # bf16 LHS packs 16 rows per vreg
    pb = num_tiles * tb
    if pb != B:
        x = jnp.pad(x, ((0, pb - B), (0, 0)))

    q, act = pl.pallas_call(
        duel_dqn_kernel,
        out_shape=(
            jax.ShapeDtypeStruct((pb, A), jnp.float32),
            jax.ShapeDtypeStruct((pb, 1), jnp.int32),
        ),
        grid=(num_tiles,),
        in_specs=[
            pl.BlockSpec((tb, F), lambda i: (i, 0)),   # x: tiled over batch (f32)
            pl.BlockSpec((F, H), lambda i: (0, 0)),    # w1: VMEM-resident
            pl.BlockSpec((1, H), lambda i: (0, 0)),    # b1: resident
            pl.BlockSpec((H, A), lambda i: (0, 0)),    # wq: resident (fused head)
            pl.BlockSpec((1, A), lambda i: (0, 0)),    # bq: resident (fused bias)
        ],
        out_specs=(
            pl.BlockSpec((tb, A), lambda i: (i, 0)),
            pl.BlockSpec((tb, 1), lambda i: (i, 0)),
        ),
        compiler_params=pltpu.CompilerParams(
            dimension_semantics=("parallel",)),
    )(x, w1, b1, wq, bq)
    return q[:B], act[:B, 0]


def init_params(key, in_features, n_actions, hidden=256):
    """torch.nn.Linear-style init (uniform ±1/sqrt(fan_in)); weights stored [in, out]."""
    k1, k2, k3, k4, k5, k6 = jax.random.split(key, 6)

    def lin(kw, kb, fan_in, fan_out):
        bound = 1.0 / jnp.sqrt(jnp.float32(fan_in))
        w = jax.random.uniform(kw, (fan_in, fan_out), jnp.float32, -bound, bound)
        b = jax.random.uniform(kb, (1, fan_out), jnp.float32, -bound, bound)
        return w, b

    w1, b1 = lin(k1, k2, in_features, hidden)   # self.input
    wa, ba = lin(k3, k4, hidden, n_actions)     # self.fc_adv
    wv, bv = lin(k5, k6, hidden, 1)             # self.fc_val
    return (w1, b1, wv, bv, wa, ba)


def fuse_params(raw_params):
    """Fold the dueling combine into a single head weight/bias (static precompute).

    Q = V + (A - mean_a A)  with  V = h@wv + bv,  A = h@wa + ba
      = h @ (wv + wa - mean_a(wa)) + (bv + ba - mean_a(ba))

    Note: storing wq in bf16 bakes the mean-subtraction into rounded weights; for
    near-tied Q-values the greedy action can differ from the f32 two-head reference.
    """
    w1, b1, wv, bv, wa, ba = raw_params
    wq = wv + wa - jnp.mean(wa, axis=1, keepdims=True)   # [H, A]
    bq = bv + ba - jnp.mean(ba, axis=1, keepdims=True)   # [1, A]
    return (w1.astype(jnp.bfloat16), b1.astype(jnp.float32),
            wq.astype(jnp.bfloat16), bq.astype(jnp.float32))


def duel_dqn_ref(x, raw_params):
    """Pure-JAX f32 reference with the original PyTorch module's semantics."""
    w1, b1, wv, bv, wa, ba = raw_params
    h = jnp.maximum(x.astype(jnp.float32) @ w1 + b1, 0.0)
    val = h @ wv + bv
    adv = h @ wa + ba
    return val + (adv - jnp.mean(adv, axis=-1, keepdims=True))


if __name__ == "__main__":
    # Acrobot-v1: observation dim = 6, actions = 3. Small batch of 8 (per-step RL path).
    in_features, n_actions, batch = 6, 3, 8

    key = jax.random.PRNGKey(0)
    kx, kp = jax.random.split(key)
    x = jax.random.normal(kx, (batch, in_features), jnp.float32)
    raw = init_params(kp, in_features, n_actions)
    params = fuse_params(raw)

    fwd = jax.jit(duel_dqn_forward)
    q, act = fwd(x, params)
    q, act = jax.block_until_ready((q, act))

    q_ref = duel_dqn_ref(x, raw)
    assert q.shape == (batch, n_actions)
    assert act.shape == (batch,)
    # bf16 MXU operands (f32 accumulation) -> slightly loosened tolerance vs f32 reference.
    assert jnp.allclose(q, q_ref, atol=3e-2, rtol=3e-2), "Q mismatch vs reference"
    # Greedy action must match the kernel's own Q exactly.
    assert jnp.array_equal(act, jnp.argmax(q, axis=-1).astype(act.dtype)), "argmax mismatch"
    # And match the f32 reference whenever the reference isn't near-tied (bf16 can
    # legitimately flip ties; don't make the test flaky on those).
    ref_act = jnp.argmax(q_ref, axis=-1).astype(act.dtype)
    qs = jnp.sort(q_ref, axis=-1)
    ref_gap = qs[:, -1] - qs[:, -2]
    assert bool(jnp.all((act == ref_act) | (ref_gap < 5e-2))), "greedy action mismatch vs reference"

    print("KERNEL_OK")
</pallas_src>

<mosaic_0001>
module attributes {stable_mosaic.version = 11 : i64} {
  func.func @duel_dqn_kernel(%arg0: i32, %arg1: memref<8x6xf32, #tpu.memory_space<vmem>>, %arg2: memref<6x256xbf16, #tpu.memory_space<vmem>>, %arg3: memref<1x256xf32, #tpu.memory_space<vmem>>, %arg4: memref<256x3xbf16, #tpu.memory_space<vmem>>, %arg5: memref<1x3xf32, #tpu.memory_space<vmem>>, %arg6: memref<8x3xf32, #tpu.memory_space<vmem>>, %arg7: memref<8x1xi32, #tpu.memory_space<vmem>>) attributes {dimension_semantics = [#tpu.dimension_semantics<parallel>], iteration_bounds = array<i64: 1>, scalar_prefetch = 0 : i64, scratch_operands = 0 : i64, tpu.core_type = #tpu.core_type<tc>, window_params = [{transform_indices = @transform_0, window_bounds = array<i64: 8, 6>}, {pipeline_mode = #tpu.pipeline_mode<synchronous>, transform_indices = @transform_1, window_bounds = array<i64: 6, 256>}, {pipeline_mode = #tpu.pipeline_mode<synchronous>, transform_indices = @transform_2, window_bounds = array<i64: 1, 256>}, {pipeline_mode = #tpu.pipeline_mode<synchronous>, transform_indices = @transform_3, window_bounds = array<i64: 256, 3>}, {pipeline_mode = #tpu.pipeline_mode<synchronous>, transform_indices = @transform_4, window_bounds = array<i64: 1, 3>}, {transform_indices = @transform_5, window_bounds = array<i64: 8, 3>}, {transform_indices = @transform_6, window_bounds = array<i64: 8, 1>}]} {
    %c0 = arith.constant 0 : index
    %c0_0 = arith.constant 0 : index
    %0 = vector.load %arg1[%c0, %c0_0] : memref<8x6xf32, #tpu.memory_space<vmem>>, vector<8x6xf32>
    %1 = arith.truncf %0 : vector<8x6xf32> to vector<8x6xbf16>
    %c0_1 = arith.constant 0 : index
    %c0_2 = arith.constant 0 : index
    %2 = vector.load %arg2[%c0_1, %c0_2] : memref<6x256xbf16, #tpu.memory_space<vmem>>, vector<6x256xbf16>
    %cst = arith.constant dense<0.000000e+00> : vector<8x256xf32>
    %3 = tpu.matmul %1, %2, %cst {dimension_numbers = #tpu.dot_dimension_numbers<[1], [0], [0], [1], [0, 0, 1, 1], [], []>} : vector<8x6xbf16>, vector<6x256xbf16>, vector<8x256xf32> -> vector<8x256xf32>
    %c0_3 = arith.constant 0 : index
    %c0_4 = arith.constant 0 : index
    %4 = vector.load %arg3[%c0_3, %c0_4] : memref<1x256xf32, #tpu.memory_space<vmem>>, vector<1x256xf32>
    %5 = vector.broadcast %4 : vector<1x256xf32> to vector<8x256xf32>
    %6 = arith.addf %3, %5 : vector<8x256xf32>
    %cst_5 = arith.constant 0.000000e+00 : f32
    %7 = vector.broadcast %cst_5 : f32 to vector<8x256xf32>
    %8 = arith.maximumf %6, %7 : vector<8x256xf32>
    %9 = arith.truncf %8 : vector<8x256xf32> to vector<8x256xbf16>
    %c0_6 = arith.constant 0 : index
    %c0_7 = arith.constant 0 : index
    %10 = vector.load %arg4[%c0_6, %c0_7] : memref<256x3xbf16, #tpu.memory_space<vmem>>, vector<256x3xbf16>
    %cst_8 = arith.constant dense<0.000000e+00> : vector<8x3xf32>
    %11 = tpu.matmul %9, %10, %cst_8 {dimension_numbers = #tpu.dot_dimension_numbers<[1], [0], [0], [1], [0, 0, 1, 1], [], []>} : vector<8x256xbf16>, vector<256x3xbf16>, vector<8x3xf32> -> vector<8x3xf32>
    %c0_9 = arith.constant 0 : index
    %c0_10 = arith.constant 0 : index
    %12 = vector.load %arg5[%c0_9, %c0_10] : memref<1x3xf32, #tpu.memory_space<vmem>>, vector<1x3xf32>
    %13 = vector.broadcast %12 : vector<1x3xf32> to vector<8x3xf32>
    %14 = arith.addf %11, %13 : vector<8x3xf32>
    %c0_11 = arith.constant 0 : index
    %c0_12 = arith.constant 0 : index
    %15 = vector.load %arg6[%c0_11, %c0_12] : memref<8x3xf32, #tpu.memory_space<vmem>>, vector<8x3xf32>
    tpu.vector_store %arg6[%c0_11, %c0_12], %14 {strides = array<i32>} : memref<8x3xf32, #tpu.memory_space<vmem>>, vector<8x3xf32>,
    %16 = tpu.iota {dimensions = array<i32: 1>} : vector<8x3xi32>
    %cst_13 = arith.constant dense<0xFF800000> : vector<8xf32>
    %17 = vector.multi_reduction <maximumf>, %14, %cst_13 [1] : vector<8x3xf32> to vector<8xf32>
    %18 = vector.shape_cast %17 : vector<8xf32> to vector<8x1xf32>
    %19 = vector.broadcast %18 : vector<8x1xf32> to vector<8x3xf32>
    %20 = arith.cmpf oeq, %14, %19 : vector<8x3xf32>
    %c3_i32 = arith.constant 3 : i32
    %21 = vector.broadcast %c3_i32 : i32 to vector<8x3xi32>
    %22 = arith.select %20, %16, %21 : vector<8x3xi1>, vector<8x3xi32>
    %cst_14 = arith.constant dense<2147483647> : vector<8xi32>
    %23 = vector.multi_reduction <minsi>, %22, %cst_14 [1] : vector<8x3xi32> to vector<8xi32>
    %24 = vector.shape_cast %23 : vector<8xi32> to vector<8x1xi32>
    %c0_15 = arith.constant 0 : index
    %c0_16 = arith.constant 0 : index
    %25 = vector.load %arg7[%c0_15, %c0_16] : memref<8x1xi32, #tpu.memory_space<vmem>>, vector<8x1xi32>
    tpu.vector_store %arg7[%c0_15, %c0_16], %24 {strides = array<i32>} : memref<8x1xi32, #tpu.memory_space<vmem>>, vector<8x1xi32>,
    return
  }
  func.func @transform_0(%arg0: i32) -> (i32, i32) {
    %c0_i32 = arith.constant 0 : i32
    %c0_i32_0 = arith.constant 0 : i32
    return %arg0, %c0_i32 : i32, i32
  }
  func.func @transform_1(%arg0: i32) -> (i32, i32) {
    %c0_i32 = arith.constant 0 : i32
    %c0_i32_0 = arith.constant 0 : i32
    %c0_i32_1 = arith.constant 0 : i32
    return %c0_i32, %c0_i32_0 : i32, i32
  }
  func.func @transform_2(%arg0: i32) -> (i32, i32) {
    %c0_i32 = arith.constant 0 : i32
    %c0_i32_0 = arith.constant 0 : i32
    %c0_i32_1 = arith.constant 0 : i32
    return %c0_i32, %c0_i32_0 : i32, i32
  }
  func.func @transform_3(%arg0: i32) -> (i32, i32) {
    %c0_i32 = arith.constant 0 : i32
    %c0_i32_0 = arith.constant 0 : i32
    %c0_i32_1 = arith.constant 0 : i32
    return %c0_i32, %c0_i32_0 : i32, i32
  }
  func.func @transform_4(%arg0: i32) -> (i32, i32) {
    %c0_i32 = arith.constant 0 : i32
    %c0_i32_0 = arith.constant 0 : i32
    %c0_i32_1 = arith.constant 0 : i32
    return %c0_i32, %c0_i32_0 : i32, i32
  }
  func.func @transform_5(%arg0: i32) -> (i32, i32) {
    %c0_i32 = arith.constant 0 : i32
    %c0_i32_0 = arith.constant 0 : i32
    return %arg0, %c0_i32 : i32, i32
  }
  func.func @transform_6(%arg0: i32) -> (i32, i32) {
    %c0_i32 = arith.constant 0 : i32
    %c0_i32_0 = arith.constant 0 : i32
    return %arg0, %c0_i32 : i32, i32
  }
}

</mosaic_0001>

<llo_original>
// kernel: duel_dqn_forward.1
$region0: #{duel_dqn_forward.1}
  #allocation0 [shape = 'u32[]', space=smem, size = 0x4, offset = 0x4, fixed_abs, tag = 'smem constant byte address 0x4 - core index']
  #allocation1 [shape = 'u32[144,128]{1,0:T(1,128)}', space=vmem, size = 0x12000, scoped, tag = 'internal scratch']
  %s0 = inlined_call_operand.vmem [shape: f32[8,6], index: 0, kind: input, shape index: {}]
  %s1 = inlined_call_operand.vmem [shape: bf16[6,256], index: 1, kind: input, shape index: {}]
  %s2 = inlined_call_operand.vmem [shape: f32[1,256], index: 2, kind: input, shape index: {}]
  %s3 = inlined_call_operand.vmem [shape: bf16[256,3], index: 3, kind: input, shape index: {}]
  %s4 = inlined_call_operand.vmem [shape: f32[1,3], index: 4, kind: input, shape index: {}]
  %s5 = inlined_call_operand.vmem [shape: f32[8,3], index: 5, kind: output, shape index: {0}]
  %s6 = inlined_call_operand.vmem [shape: s32[8,1], index: 6, kind: output, shape index: {1}]
  %7 = xla_tuple %s5, %s6
  %s8 = sld [smem:[#allocation0]]
  $region38: #{duel_dqn_forward.1} parent=0
    _
  %s10 = ssub.s32 1, %s8
  %s11 = scalar_select 0, %s10, %s8
  // Predicated region
  $region2: #{duel_dqn_forward.1} parent=0 // pred_check
    _
  $region3: #{duel_dqn_forward.1} parent=0 // pred_check_branch
    %13 = sbr.rel (0) target = $region5
  $region4: #{duel_dqn_forward.1} parent=0 // pred_region
    _
  $region5: #{duel_dqn_forward.1} parent=0 // pred_fallthru
    _
  // Predicated region
  $region6: #{duel_dqn_forward.1} parent=0 // pred_check
    _
  $region7: #{duel_dqn_forward.1} parent=0 // pred_check_branch
    %15 = sbr.rel (0) target = $region9
  $region8: #{duel_dqn_forward.1} parent=0 // pred_region
    _
  $region9: #{duel_dqn_forward.1} parent=0 // pred_fallthru
    _
  // Predicated region
  $region10: #{duel_dqn_forward.1} parent=0 // pred_check
    _
  $region11: #{duel_dqn_forward.1} parent=0 // pred_check_branch
    %17 = sbr.rel (0) target = $region13
  $region12: #{duel_dqn_forward.1} parent=0 // pred_region
    _
  $region13: #{duel_dqn_forward.1} parent=0 // pred_fallthru
    _
  // Predicated region
  $region14: #{duel_dqn_forward.1} parent=0 // pred_check
    _
  $region15: #{duel_dqn_forward.1} parent=0 // pred_check_branch
    %19 = sbr.rel (0) target = $region17
  $region16: #{duel_dqn_forward.1} parent=0 // pred_region
    _
  $region17: #{duel_dqn_forward.1} parent=0 // pred_fallthru
    _
  // Predicated region
  $region18: #{duel_dqn_forward.1} parent=0 // pred_check
    _
  $region19: #{duel_dqn_forward.1} parent=0 // pred_check_branch
    %21 = sbr.rel (0) target = $region21
  $region20: #{duel_dqn_forward.1} parent=0 // pred_region
    _
  $region21: #{duel_dqn_forward.1} parent=0 // pred_fallthru
    _
  %v23 = vld [vmem:[%s0] sm:$0xff]
  %v24 = vpack.c.bf16 %v23, %v23
  %v25 = vld [vmem:[%s1] sm:$0x77]
  %v26 = vld [vmem:[%s2] sm:$0x3]
  %v28 = vlaneseq
  %v29 = vshrl.u32 %v28, 7
  %v30 = vsub.s32 0, %v29
  %v31 = vrot.slane %v26, %v30
  %v32 = vlaneseq
  %v33 = vshrl.u32 %v32, 7
  %v34 = vsub.s32 1, %v33
  %v35 = vrot.slane %v26, %v34
  %v39 = vunpack.c.l.b16 %v25
  %v40 = vunpack.c.h.b16 %v25
  %v41 = vpack.c.b16 %v39, %v39
  %v42 = vpack.c.b16 %v40, %v40
  %vm43 = vcmask 48128
  %v45 = vsel %vm43, %v24, 0
  %vm47 = vcmask 1042432
  %v49 = vsel %vm47, %v41, 0
  %v52 = vsel %vm47, %v42, 0
  %54 = vmatprep.subr.bf16.mxu0 %v52
  %55 = vmatpush1.bf16.msra.mxu0 %v49
  %56 = vmatprep.subr.bf16.mxu0 0
  %57 = vmatpush1.bf16.msra.mxu0 0
  %58 = vmatprep.subr.bf16.mxu0 0
  %59 = vmatpush1.bf16.msra.mxu0 0
  %60 = vmatprep.subr.bf16.mxu0 0
  %61 = vmatpush1.bf16.msra.mxu0 0
  %62 = vmatprep.subr.bf16.mxu0 0
  %63 = vmatpush1.bf16.msra.mxu0 0
  %64 = vmatprep.subr.bf16.mxu0 0
  %65 = vmatpush1.bf16.msra.mxu0 0
  %66 = vmatprep.subr.bf16.mxu0 0
  %67 = vmatpush1.bf16.msra.mxu0 0
  %68 = vmatprep.subr.bf16.mxu0 0
  %69 = vmatpush1.bf16.msra.mxu0 0
  %70 = vmatprep.subr.bf16.mxu0 0
  %71 = vmatpush1.bf16.msra.mxu0 0
  %72 = vmatprep.subr.bf16.mxu0 0
  %73 = vmatpush1.bf16.msra.mxu0 0
  %74 = vmatprep.subr.bf16.mxu0 0
  %75 = vmatpush1.bf16.msra.mxu0 0
  %76 = vmatprep.subr.bf16.mxu0 0
  %77 = vmatpush1.bf16.msra.mxu0 0
  %78 = vmatprep.subr.bf16.mxu0 0
  %79 = vmatpush1.bf16.msra.mxu0 0
  %80 = vmatprep.subr.bf16.mxu0 0
  %81 = vmatpush1.bf16.msra.mxu0 0
  %82 = vmatprep.subr.bf16.mxu0 0
  %83 = vmatpush1.bf16.msra.mxu0 0
  %84 = vmatprep.subr.bf16.mxu0 0
  %85 = vmatpush1.bf16.msra.mxu0 0
  %86 = vmatprep.mubr.bf16.mxu0 0
  %87 = vmatmul.mubr.bf16.gmra.mrb[0].mxu0 %v45
  %v88 = vpop.f32.mrb[0].mxu0
  %v89 = vadd.f32 %v31, %v88
  %v90 = vpop.f32.mrb[0].mxu0
  %v91 = vadd.f32 %v35, %v90
  %v92 = vpop.f32.mrb[0].mxu0
  %v93 = vpop.f32.mrb[0].mxu0
  %94 = vdwg.mxu0
  %v95 = vmax.f32 %v89, 0.0
  %v96 = vmax.f32 %v91, 0.0
  %v97 = vpack.c.bf16 %v95, %v95
  %v98 = vpack.c.bf16 %v96, %v96
  %v99 = vld [vmem:[%s3] sm:$0xf]
  %v100 = vld [vmem:[%s3 + $0x4] sm:$0xf]
  %v101 = vld [vmem:[%s3 + $0x8] sm:$0xf]
  %v102 = vld [vmem:[%s3 + $0xc] sm:$0xf]
  %v103 = vld [vmem:[%s3 + $0x10] sm:$0xf]
  %v104 = vld [vmem:[%s3 + $0x14] sm:$0xf]
  %v105 = vld [vmem:[%s3 + $0x18] sm:$0xf]
  %v106 = vld [vmem:[%s3 + $0x1c] sm:$0xf]
  %v107 = vld [vmem:[%s3 + $0x20] sm:$0xf]
  %v108 = vld [vmem:[%s3 + $0x24] sm:$0xf]
  %v109 = vld [vmem:[%s3 + $0x28] sm:$0xf]
  %v110 = vld [vmem:[%s3 + $0x2c] sm:$0xf]
  %v111 = vld [vmem:[%s3 + $0x30] sm:$0xf]
  %v112 = vld [vmem:[%s3 + $0x34] sm:$0xf]
  %v113 = vld [vmem:[%s3 + $0x38] sm:$0xf]
  %v114 = vld [vmem:[%s3 + $0x3c] sm:$0xf]
  %v115 = vld [vmem:[%s3 + $0x40] sm:$0xf]
  %v116 = vld [vmem:[%s3 + $0x44] sm:$0xf]
  %v117 = vld [vmem:[%s3 + $0x48] sm:$0xf]
  %v118 = vld [vmem:[%s3 + $0x4c] sm:$0xf]
  %v119 = vld [vmem:[%s3 + $0x50] sm:$0xf]
  %v120 = vld [vmem:[%s3 + $0x54] sm:$0xf]
  %v121 = vld [vmem:[%s3 + $0x58] sm:$0xf]
  %v122 = vld [vmem:[%s3 + $0x5c] sm:$0xf]
  %v123 = vld [vmem:[%s3 + $0x60] sm:$0xf]
  %v124 = vld [vmem:[%s3 + $0x64] sm:$0xf]
  %v125 = vld [vmem:[%s3 + $0x68] sm:$0xf]
  %v126 = vld [vmem:[%s3 + $0x6c] sm:$0xf]
  %v127 = vld [vmem:[%s3 + $0x70] sm:$0xf]
  %v128 = vld [vmem:[%s3 + $0x74] sm:$0xf]
  %v129 = vld [vmem:[%s3 + $0x78] sm:$0xf]
  %v130 = vld [vmem:[%s3 + $0x7c] sm:$0xf]
  %v131 = vld [vmem:[%s4] sm:$0x1]
  %v133 = vlaneseq
  %v134 = vshrl.u32 %v133, 7
  %v135 = vsub.s32 0, %v134
  %v136 = vrot.slane %v131, %v135
  %v170 = vunpack.c.l.b16 %v99
  %v171 = vunpack.c.l.b16 %v100
  %v172 = vunpack.c.l.b16 %v101
  %v173 = vunpack.c.l.b16 %v102
  %v174 = vunpack.c.l.b16 %v103
  %v175 = vunpack.c.l.b16 %v104
  %v176 = vunpack.c.l.b16 %v105
  %v177 = vunpack.c.l.b16 %v106
  %v178 = vunpack.c.l.b16 %v107
  %v179 = vunpack.c.l.b16 %v108
  %v180 = vunpack.c.l.b16 %v109
  %v181 = vunpack.c.l.b16 %v110
  %v182 = vunpack.c.l.b16 %v111
  %v183 = vunpack.c.l.b16 %v112
  %v184 = vunpack.c.l.b16 %v113
  %v185 = vunpack.c.l.b16 %v114
  %v186 = vunpack.c.l.b16 %v115
  %v187 = vunpack.c.l.b16 %v116
  %v188 = vunpack.c.l.b16 %v117
  %v189 = vunpack.c.l.b16 %v118
  %v190 = vunpack.c.l.b16 %v119
  %v191 = vunpack.c.l.b16 %v120
  %v192 = vunpack.c.l.b16 %v121
  %v193 = vunpack.c.l.b16 %v122
  %v194 = vunpack.c.l.b16 %v123
  %v195 = vunpack.c.l.b16 %v124
  %v196 = vunpack.c.l.b16 %v125
  %v197 = vunpack.c.l.b16 %v126
  %v198 = vunpack.c.l.b16 %v127
  %v199 = vunpack.c.l.b16 %v128
  %v200 = vunpack.c.l.b16 %v129
  %v201 = vunpack.c.l.b16 %v130
  %v202 = vpack.c.b16 %v171, %v170
  %v203 = vpack.c.b16 %v173, %v172
  %v204 = vpack.c.b16 %v175, %v174
  %v205 = vpack.c.b16 %v177, %v176
  %v206 = vpack.c.b16 %v179, %v178
  %v207 = vpack.c.b16 %v181, %v180
  %v208 = vpack.c.b16 %v183, %v182
  %v209 = vpack.c.b16 %v185, %v184
  %v210 = vpack.c.b16 %v187, %v186
  %v211 = vpack.c.b16 %v189, %v188
  %v212 = vpack.c.b16 %v191, %v190
  %v213 = vpack.c.b16 %v193, %v192
  %v214 = vpack.c.b16 %v195, %v194
  %v215 = vpack.c.b16 %v197, %v196
  %v216 = vpack.c.b16 %v199, %v198
  %v217 = vpack.c.b16 %v201, %v200
  %234 = vmatprep.subr.bf16.mxu0 0
  %235 = vmatpush1.bf16.msra.mxu0 %v202
  %236 = vmatprep.subr.bf16.mxu0 0
  %237 = vmatpush1.bf16.msra.mxu0 %v203
  %238 = vmatprep.subr.bf16.mxu0 0
  %239 = vmatpush1.bf16.msra.mxu0 %v204
  %240 = vmatprep.subr.bf16.mxu0 0
  %241 = vmatpush1.bf16.msra.mxu0 %v205
  %242 = vmatprep.subr.bf16.mxu0 0
  %243 = vmatpush1.bf16.msra.mxu0 %v206
  %244 = vmatprep.subr.bf16.mxu0 0
  %245 = vmatpush1.bf16.msra.mxu0 %v207
  %246 = vmatprep.subr.bf16.mxu0 0
  %247 = vmatpush1.bf16.msra.mxu0 %v208
  %248 = vmatprep.subr.bf16.mxu0 0
  %249 = vmatpush1.bf16.msra.mxu0 %v209
  %250 = vmatprep.subr.bf16.mxu0 0
  %251 = vmatpush1.bf16.msra.mxu0 %v210
  %252 = vmatprep.subr.bf16.mxu0 0
  %253 = vmatpush1.bf16.msra.mxu0 %v211
  %254 = vmatprep.subr.bf16.mxu0 0
  %255 = vmatpush1.bf16.msra.mxu0 %v212
  %256 = vmatprep.subr.bf16.mxu0 0
  %257 = vmatpush1.bf16.msra.mxu0 %v213
  %258 = vmatprep.subr.bf16.mxu0 0
  %259 = vmatpush1.bf16.msra.mxu0 %v214
  %260 = vmatprep.subr.bf16.mxu0 0
  %261 = vmatpush1.bf16.msra.mxu0 %v215
  %262 = vmatprep.subr.bf16.mxu0 0
  %263 = vmatpush1.bf16.msra.mxu0 %v216
  %264 = vmatprep.subr.bf16.mxu0 0
  %265 = vmatpush1.bf16.msra.mxu0 %v217
  %266 = vmatprep.mubr.bf16.mxu0 %v98
  %267 = vmatmul.mubr.bf16.gmra.mrb[0].mxu0 %v97
  %v268 = vpop.f32.mrb[0].mxu0
  %v269 = vadd.f32 %v136, %v268
  %v270 = vpop.f32.mrb[0].mxu0
  %v271 = vpop.f32.mrb[0].mxu0
  %v272 = vpop.f32.mrb[0].mxu0
  %273 = vdwg.mxu0
  %vm274 = vcmask 23552
  %275 = vst.msk [vmem:[%s5] sm:$0xff] %vm274, %v269
  %v276 = vlaneseq
  %v277 = vand.u32 %v276, 127
  %v278 = vsel %vm274, %v269, -inf
  %279 = vmax.xlane.f32.xlu0 %v278
  %v280 = vpop.xlane.xlu0 %279
  %vm281 = vcmp.eq.f32.partialorder %v269, %v280
  %v282 = vsel %vm281, %v277, 3
  %v283 = vsel %vm274, %v282, 2147483647
  %v284 = vand.u32 %v283, 65535
  %v285 = vshra.s32 %v283, 16
  %v286 = vcvt.s32.f32 %v284
  %v287 = vcvt.s32.f32 %v285
  %288 = vmin.xlane.f32.xlu0 %v287
  %v289 = vpop.xlane.xlu0 %288
  %vm290 = vcmp.eq.f32.partialorder %v287, %v289
  %v291 = vsel %vm290, %v286, inf
  %292 = vmin.xlane.f32.xlu0 %v291
  %v293 = vpop.xlane.xlu0 %292
  %v294 = vcvt.f32.s32 %v293
  %v295 = vcvt.f32.s32 %v289
  %v296 = vshll.u32 %v295, 16
  %v297 = vadd.s32 %v296, %v294
  %vm298 = vcmask 7168
  %299 = vst.msk [vmem:[%s6] sm:$0xff] %vm298, %v297
  // Predicated region
  $region22: #{duel_dqn_forward.1} parent=0 // pred_check
    _
  $region23: #{duel_dqn_forward.1} parent=0 // pred_check_branch
    %301 = sbr.rel (0) target = $region25
  $region24: #{duel_dqn_forward.1} parent=0 // pred_region
    _
  $region25: #{duel_dqn_forward.1} parent=0 // pred_fallthru
    _
  // Predicated region
  $region26: #{duel_dqn_forward.1} parent=0 // pred_check
    _
  $region27: #{duel_dqn_forward.1} parent=0 // pred_check_branch
    %303 = sbr.rel (0) target = $region29
  $region28: #{duel_dqn_forward.1} parent=0 // pred_region
    _
  $region29: #{duel_dqn_forward.1} parent=0 // pred_fallthru
    _
  // Predicated region
  $region30: #{duel_dqn_forward.1} parent=0 // pred_check
    _
  $region31: #{duel_dqn_forward.1} parent=0 // pred_check_branch
    %305 = sbr.rel (0) target = $region33
  $region32: #{duel_dqn_forward.1} parent=0 // pred_region
    _
  $region33: #{duel_dqn_forward.1} parent=0 // pred_fallthru
    _
  // Predicated region
  $region34: #{duel_dqn_forward.1} parent=0 // pred_check
    _
  $region35: #{duel_dqn_forward.1} parent=0 // pred_check_branch
    %307 = sbr.rel (0) target = $region37
  $region36: #{duel_dqn_forward.1} parent=0 // pred_region
    _
  $region37: #{duel_dqn_forward.1} parent=0 // pred_fallthru
    _

</llo_original>
